<compile_context>
chip_gen: v6e
topology: v6e:2x2x1
jax: 0.10.0
libtpu: 0.0.40
codegen_flags: <defaults>
</compile_context>

<pallas_src>
import jax
import jax.numpy as jnp
from jax.experimental import pallas as pl
from jax.experimental.pallas import tpu as pltpu


# ----------------------------------------------------------------------------
# Kernel 1: get_hrt — entity pooling + localized context pooling
# ----------------------------------------------------------------------------
def hrt_kernel(starts_ref, seq_ref, attr_ref, hrt_ref):
    i = pl.program_id(0)
    L = seq_ref.shape[1]
    H = seq_ref.shape[2]
    NH = attr_ref.shape[3]
    max_mentions = attr_ref.shape[1] // 2
    NEG = jnp.float32(-1e30)

    def pool_entity(e_idx):
        lse_inputs = []
        att_sum = jnp.zeros((L, NH), jnp.float32)
        cnt = jnp.float32(0.0)
        for m in range(max_mentions):
            slot = e_idx * max_mentions + m
            s = starts_ref[i, slot]
            valid = (s >= 0) & (s + 1 < L)
            idx = jnp.where(valid, s + 1, 0)
            emb = seq_ref[0, pl.ds(idx, 1), :]            # (1, H)
            attm = attr_ref[0, slot, :, :]                # (L, NH) gathered mention row
            lse_inputs.append(jnp.where(valid, emb, NEG))
            att_sum = att_sum + jnp.where(valid, attm, 0.0)
            cnt = cnt + valid.astype(jnp.float32)
        # masked logsumexp over mentions (matches torch.logsumexp / 1-mention path)
        m_max = lse_inputs[0]
        for x in lse_inputs[1:]:
            m_max = jnp.maximum(m_max, x)
        ssum = jnp.zeros_like(m_max)
        for x in lse_inputs:
            ssum = ssum + jnp.exp(x - m_max)
        lse = m_max + jnp.log(ssum)                       # (1, H)
        has = cnt > 0.0
        e_emb = jnp.where(has, lse, 0.0)                               # (1, H)
        e_att = jnp.where(has, att_sum / jnp.maximum(cnt, 1.0), 0.0)   # (L, NH)
        return e_emb, e_att

    h_emb, h_att = pool_entity(0)   # entity 0 = head
    t_emb, t_att = pool_entity(1)   # entity 1 = tail

    # ht_att = mean over heads, then normalize over L
    ht = jnp.mean(h_att * t_att, axis=1, keepdims=True)            # (L, 1)
    ht = ht / (jnp.sum(ht, axis=0, keepdims=True) + 1e-5)          # (L, 1)
    # localized context pooling as a VPU weighted reduction (no 1-row MXU matmul)
    rs = jnp.sum(ht * seq_ref[0, :, :], axis=0, keepdims=True)     # (1, H)

    # fused (1, 3, H) output slab: rows = [hs, ts, rs]
    hrt_ref[:, 0:1, :] = h_emb.reshape(1, 1, H)
    hrt_ref[:, 1:2, :] = t_emb.reshape(1, 1, H)
    hrt_ref[:, 2:3, :] = rs.reshape(1, 1, H)


def get_hrt_pallas(seq, att_rows, starts):
    B, L, H = seq.shape
    n_slots, NH = att_rows.shape[1], att_rows.shape[3]
    grid_spec = pltpu.PrefetchScalarGridSpec(
        num_scalar_prefetch=1,
        grid=(B,),
        in_specs=[
            pl.BlockSpec((1, L, H), lambda i, st: (i, 0, 0)),
            pl.BlockSpec((1, n_slots, L, NH), lambda i, st: (i, 0, 0, 0)),
        ],
        out_specs=pl.BlockSpec((1, 3, H), lambda i, st: (i, 0, 0)),
    )
    out = pl.pallas_call(
        hrt_kernel,
        grid_spec=grid_spec,
        out_shape=jax.ShapeDtypeStruct((B, 3, H), jnp.float32),
        compiler_params=pltpu.CompilerParams(dimension_semantics=("parallel",)),
    )(starts, seq, att_rows)
    return out[:, 0, :], out[:, 1, :], out[:, 2, :]


# ----------------------------------------------------------------------------
# Kernel 2: head / tail extractors  tanh(Linear(cat([x, rs, ner])))
# ----------------------------------------------------------------------------
def extractor_kernel(hs_ref, ts_ref, rs_ref, hs_ner_ref, ts_ner_ref,
                     wh_ref, bh_ref, wt_ref, bt_ref,
                     hs_out_ref, ts_out_ref):
    f32 = jnp.float32
    H = hs_ref.shape[1]
    rs = rs_ref[...]

    def extract(x_ref, ner_ref, w_ref, b_ref):
        w = w_ref[...]
        y = (jnp.dot(x_ref[...], w[:H, :], preferred_element_type=f32)
             + jnp.dot(rs, w[H:2 * H, :], preferred_element_type=f32)
             + jnp.dot(ner_ref[...], w[2 * H:, :], preferred_element_type=f32)
             + b_ref[...])
        return jnp.tanh(y)

    hs_out_ref[...] = extract(hs_ref, hs_ner_ref, wh_ref, bh_ref)
    ts_out_ref[...] = extract(ts_ref, ts_ner_ref, wt_ref, bt_ref)


def extract_pallas(hs, ts, rs, hs_ner, ts_ner, params):
    B, H = hs.shape
    T = hs_ner.shape[1]
    din, E = params["wh"].shape
    TE = E
    for cand in (512, 256, 128):
        if E % cand == 0:
            TE = cand
            break
    hs_e, ts_e = pl.pallas_call(
        extractor_kernel,
        grid=(E // TE,),
        in_specs=[
            pl.BlockSpec((B, H), lambda j: (0, 0)),
            pl.BlockSpec((B, H), lambda j: (0, 0)),
            pl.BlockSpec((B, H), lambda j: (0, 0)),
            pl.BlockSpec((B, T), lambda j: (0, 0)),
            pl.BlockSpec((B, T), lambda j: (0, 0)),
            pl.BlockSpec((din, TE), lambda j: (0, j)),
            pl.BlockSpec((1, TE), lambda j: (0, j)),
            pl.BlockSpec((din, TE), lambda j: (0, j)),
            pl.BlockSpec((1, TE), lambda j: (0, j)),
        ],
        out_specs=(pl.BlockSpec((B, TE), lambda j: (0, j)),
                   pl.BlockSpec((B, TE), lambda j: (0, j))),
        out_shape=(jax.ShapeDtypeStruct((B, E), jnp.float32),
                   jax.ShapeDtypeStruct((B, E), jnp.float32)),
        compiler_params=pltpu.CompilerParams(dimension_semantics=("parallel",)),
    )(hs, ts, rs, hs_ner, ts_ner,
      params["wh"], params["bh"], params["wt"], params["bt"])
    return hs_e, ts_e


# ----------------------------------------------------------------------------
# Kernel 3: bilinear (logits) + ATLoss.get_label, contraction dim tiled
# ----------------------------------------------------------------------------
def bilinear_kernel(bl_ref, wb_ref, bb_ref, labels_ref, logits_ref, acc_ref):
    k = pl.program_id(0)

    @pl.when(k == 0)
    def _():
        acc_ref[...] = jnp.zeros_like(acc_ref)

    acc_ref[...] += jnp.dot(bl_ref[...], wb_ref[...],
                            preferred_element_type=jnp.float32)

    @pl.when(k == pl.num_programs(0) - 1)
    def _():
        logits = acc_ref[...] + bb_ref[...]
        logits_ref[...] = logits
        # ATLoss.get_label with threshold=None -> per-row threshold = logits[:, 0].
        # (top-k clause with k == n_classes is a no-op and is dropped.)
        th = logits[:, 0:1]
        out = (logits > th).astype(jnp.float32)
        none_col = (jnp.sum(out, axis=1, keepdims=True) == 0.0).astype(jnp.float32)
        col = jax.lax.broadcasted_iota(jnp.int32, logits.shape, dimension=1)
        labels_ref[...] = jnp.where(col == 0, none_col, out)


def bilinear_pallas(bl, wb, bb):
    B, K = bl.shape
    C = wb.shape[1]
    Cp = ((C + 127) // 128) * 128
    # pad n_classes to a full 128-lane tile; padded bias is very negative so the
    # padded columns never pass the adaptive threshold.
    wb_p = jnp.zeros((K, Cp), jnp.float32).at[:, :C].set(wb)
    bb_p = jnp.full((1, Cp), -1e9, jnp.float32).at[:, :C].set(bb)
    TK = 512 if K % 512 == 0 else K
    labels_p, logits_p = pl.pallas_call(
        bilinear_kernel,
        grid=(K // TK,),
        in_specs=[
            pl.BlockSpec((B, TK), lambda k: (0, k)),
            pl.BlockSpec((TK, Cp), lambda k: (k, 0)),
            pl.BlockSpec((1, Cp), lambda k: (0, 0)),
        ],
        out_specs=(pl.BlockSpec((B, Cp), lambda k: (0, 0)),
                   pl.BlockSpec((B, Cp), lambda k: (0, 0))),
        out_shape=(jax.ShapeDtypeStruct((B, Cp), jnp.float32),
                   jax.ShapeDtypeStruct((B, Cp), jnp.float32)),
        scratch_shapes=[pltpu.VMEM((B, Cp), jnp.float32)],
        compiler_params=pltpu.CompilerParams(dimension_semantics=("arbitrary",)),
    )(bl, wb_p, bb_p)
    return labels_p[:, :C], logits_p[:, :C]


# ----------------------------------------------------------------------------
# Glue / full forward
# ----------------------------------------------------------------------------
def init_params(key, hidden, num_ner_tags, emb_size, block_size, n_classes):
    k = jax.random.split(key, 6)
    din = 2 * hidden + num_ner_tags
    wh = jax.random.normal(k[0], (din, emb_size), jnp.float32) / jnp.sqrt(float(din))
    bh = jax.random.normal(k[1], (1, emb_size), jnp.float32) * 0.01
    wt = jax.random.normal(k[2], (din, emb_size), jnp.float32) / jnp.sqrt(float(din))
    bt = jax.random.normal(k[3], (1, emb_size), jnp.float32) * 0.01
    wb = (jax.random.normal(k[4], (emb_size * block_size, n_classes), jnp.float32)
          / jnp.sqrt(float(emb_size * block_size)))
    bb = jax.random.normal(k[5], (1, n_classes), jnp.float32) * 0.01
    return dict(wh=wh, bh=bh, wt=wt, bt=bt, wb=wb, bb=bb)


def forward(seq, att, starts, hs_ner, ts_ner, params, block_size):
    B, L, H = seq.shape
    E = params["wh"].shape[1]

    # Gather only the 2*MAX_M mention attention rows (instead of streaming the
    # whole (NH, L, L) attention block into the kernel), transposed to (L, NH).
    pos = jnp.clip(starts + 1, 0, L - 1)                          # (B, 2M)

    def gather_one(att_b, pos_b):                                 # (NH, L, L), (2M,)
        return jnp.transpose(att_b[:, pos_b, :], (1, 2, 0))       # (2M, L, NH)

    att_rows = jax.vmap(gather_one)(att, pos)                     # (B, 2M, L, NH)

    hs, ts, rs = get_hrt_pallas(seq, att_rows, starts)
    hs_e, ts_e = extract_pallas(hs, ts, rs, hs_ner, ts_ner, params)

    # Blocked bilinear outer product: pure data rearrangement, done in the XLA
    # wrapper (per perf review) instead of giant 0/1 expansion matrices.
    ng = E // block_size
    b1 = hs_e.reshape(B, ng, block_size)
    b2 = ts_e.reshape(B, ng, block_size)
    bl = (b1[:, :, :, None] * b2[:, :, None, :]).reshape(B, E * block_size)

    labels, logits = bilinear_pallas(bl, params["wb"], params["bb"])
    return labels, logits


# ----------------------------------------------------------------------------
# Pure-JAX reference (mirrors the PyTorch forward) for a correctness check
# ----------------------------------------------------------------------------
def get_label_ref(logits, threshold=None):
    if threshold is not None:
        th = jnp.full((logits.shape[0], 1), threshold, logits.dtype)
    else:
        th = logits[:, 0:1]
    mask = (logits > th) & (logits >= jnp.min(logits, axis=1, keepdims=True))
    out = mask.astype(jnp.float32)
    out = out.at[:, 0].set((out.sum(1) == 0).astype(jnp.float32))
    return out


def reference_forward(seq, att, starts, hs_ner, ts_ner, params,
                      emb_size, block_size, max_mentions):
    B, L, H = seq.shape
    NH = att.shape[1]
    hs_l, ts_l, rs_l = [], [], []
    for i in range(B):
        embs, atts = [], []
        for e in range(2):
            ems, ats = [], []
            for m in range(max_mentions):
                s = int(starts[i, e * max_mentions + m])
                if s >= 0 and s + 1 < L:
                    ems.append(seq[i, s + 1])
                    ats.append(att[i, :, s + 1])
            if ems:
                e_emb = jax.scipy.special.logsumexp(jnp.stack(ems, 0), axis=0)
                e_att = jnp.mean(jnp.stack(ats, 0), axis=0)
            else:
                e_emb = jnp.zeros((H,), jnp.float32)
                e_att = jnp.zeros((NH, L), jnp.float32)
            embs.append(e_emb)
            atts.append(e_att)
        ht = (atts[0] * atts[1]).mean(0)
        ht = ht / (ht.sum() + 1e-5)
        rs_l.append(ht @ seq[i])
        hs_l.append(embs[0])
        ts_l.append(embs[1])
    hs = jnp.stack(hs_l)
    ts = jnp.stack(ts_l)
    rs = jnp.stack(rs_l)
    hs_inp = jnp.concatenate([hs, rs, hs_ner], axis=1)
    ts_inp = jnp.concatenate([ts, rs, ts_ner], axis=1)
    hs_e = jnp.tanh(hs_inp @ params["wh"] + params["bh"])
    ts_e = jnp.tanh(ts_inp @ params["wt"] + params["bt"])
    b1 = hs_e.reshape(B, emb_size // block_size, block_size)
    b2 = ts_e.reshape(B, emb_size // block_size, block_size)
    bl = (b1[:, :, :, None] * b2[:, :, None, :]).reshape(B, emb_size * block_size)
    logits = bl @ params["wb"] + params["bb"]
    return get_label_ref(logits), logits


# ----------------------------------------------------------------------------
if __name__ == "__main__":
    # small, BERT-like shapes
    B, L, H, NH = 2, 16, 32, 4         # batch, seq len, hidden, attention heads
    T, E, BS, C = 6, 64, 8, 16         # ner tags, emb_size, block_size, n_classes
    MAX_M = 2                          # max mentions per entity

    key = jax.random.PRNGKey(0)
    ks = jax.random.split(key, 8)

    seq = jax.random.normal(ks[0], (B, L, H), jnp.float32)
    att = jax.nn.softmax(jax.random.normal(ks[1], (B, NH, L, L), jnp.float32), axis=-1)
    # entity mention start positions: [head m0, head m1, tail m0, tail m1], -1 = padding
    starts = jnp.array([[2, 5, 7, -1],
                        [1, -1, 10, 12]], dtype=jnp.int32)
    hs_ner = jax.random.uniform(ks[2], (B, T), jnp.float32)
    ts_ner = jax.random.uniform(ks[3], (B, T), jnp.float32)

    params = init_params(ks[4], H, T, E, BS, C)

    labels, logits = jax.block_until_ready(
        forward(seq, att, starts, hs_ner, ts_ner, params, BS))

    ref_labels, ref_logits = reference_forward(
        seq, att, starts, hs_ner, ts_ner, params, E, BS, MAX_M)

    assert labels.shape == (B, C) and logits.shape == (B, C)
    assert bool(jnp.all(jnp.isfinite(logits)))
    assert bool(jnp.allclose(logits, ref_logits, rtol=2e-2, atol=2e-2)), "logits mismatch"
    # labels are a deterministic function of the kernel's own logits
    assert bool(jnp.array_equal(labels, get_label_ref(logits))), "labels mismatch"

    print("KERNEL_OK")
</pallas_src>

<mosaic_0001>
module attributes {stable_mosaic.version = 11 : i64} {
  func.func @hrt_kernel(%arg0: i32, %arg1: memref<2x4xi32, #tpu.memory_space<smem>>, %arg2: memref<1x16x32xf32, #tpu.memory_space<vmem>>, %arg3: memref<1x4x16x4xf32, #tpu.memory_space<vmem>>, %arg4: memref<1x3x32xf32, #tpu.memory_space<vmem>>) attributes {dimension_semantics = [#tpu.dimension_semantics<parallel>], iteration_bounds = array<i64: 2>, scalar_prefetch = 1 : i64, scratch_operands = 0 : i64, tpu.core_type = #tpu.core_type<tc>, window_params = [{transform_indices = @transform_0, window_bounds = array<i64: 1, 16, 32>}, {transform_indices = @transform_1, window_bounds = array<i64: 1, 4, 16, 4>}, {transform_indices = @transform_2, window_bounds = array<i64: 1, 3, 32>}]} {
    %cst = arith.constant 0.000000e+00 : f32
    %0 = vector.broadcast %cst : f32 to vector<16x4xf32>
    %1 = arith.index_cast %arg0 : i32 to index
    %c0 = arith.constant 0 : index
    %2 = memref.load %arg1[%1, %c0] : memref<2x4xi32, #tpu.memory_space<smem>>
    %c0_i32 = arith.constant 0 : i32
    %3 = arith.cmpi sge, %2, %c0_i32 : i32
    %c1_i32 = arith.constant 1 : i32
    %4 = arith.addi %2, %c1_i32 : i32
    %c16_i32 = arith.constant 16 : i32
    %5 = arith.cmpi slt, %4, %c16_i32 : i32
    %6 = arith.andi %3, %5 : i1
    %c1_i32_0 = arith.constant 1 : i32
    %7 = arith.addi %2, %c1_i32_0 : i32
    %c0_i32_1 = arith.constant 0 : i32
    %8 = arith.select %6, %7, %c0_i32_1 : i32
    %c0_2 = arith.constant 0 : index
    %9 = arith.index_cast %8 : i32 to index
    %c0_3 = arith.constant 0 : index
    %10 = vector.load %arg2[%c0_2, %9, %c0_3] : memref<1x16x32xf32, #tpu.memory_space<vmem>>, vector<1x1x32xf32>
    %11 = vector.shape_cast %10 : vector<1x1x32xf32> to vector<1x32xf32>
    %c0_4 = arith.constant 0 : index
    %c0_5 = arith.constant 0 : index
    %c0_6 = arith.constant 0 : index
    %c0_7 = arith.constant 0 : index
    %12 = vector.load %arg3[%c0_4, %c0_5, %c0_6, %c0_7] : memref<1x4x16x4xf32, #tpu.memory_space<vmem>>, vector<1x1x16x4xf32>
    %13 = vector.shape_cast %12 : vector<1x1x16x4xf32> to vector<16x4xf32>
    %cst_8 = arith.constant -1.000000e+30 : f32
    %14 = vector.broadcast %cst_8 : f32 to vector<1x32xf32>
    %15 = arith.select %6, %11, %14 : vector<1x32xf32>
    %cst_9 = arith.constant 0.000000e+00 : f32
    %16 = vector.broadcast %cst_9 : f32 to vector<16x4xf32>
    %17 = arith.select %6, %13, %16 : vector<16x4xf32>
    %18 = arith.addf %0, %17 : vector<16x4xf32>
    %19 = arith.extui %6 : i1 to i32
    %20 = arith.sitofp %19 : i32 to f32
    %cst_10 = arith.constant 0.000000e+00 : f32
    %21 = arith.addf %cst_10, %20 : f32
    %22 = arith.index_cast %arg0 : i32 to index
    %c1 = arith.constant 1 : index
    %23 = memref.load %arg1[%22, %c1] : memref<2x4xi32, #tpu.memory_space<smem>>
    %c0_i32_11 = arith.constant 0 : i32
    %24 = arith.cmpi sge, %23, %c0_i32_11 : i32
    %c1_i32_12 = arith.constant 1 : i32
    %25 = arith.addi %23, %c1_i32_12 : i32
    %c16_i32_13 = arith.constant 16 : i32
    %26 = arith.cmpi slt, %25, %c16_i32_13 : i32
    %27 = arith.andi %24, %26 : i1
    %c1_i32_14 = arith.constant 1 : i32
    %28 = arith.addi %23, %c1_i32_14 : i32
    %c0_i32_15 = arith.constant 0 : i32
    %29 = arith.select %27, %28, %c0_i32_15 : i32
    %c0_16 = arith.constant 0 : index
    %30 = arith.index_cast %29 : i32 to index
    %c0_17 = arith.constant 0 : index
    %31 = vector.load %arg2[%c0_16, %30, %c0_17] : memref<1x16x32xf32, #tpu.memory_space<vmem>>, vector<1x1x32xf32>
    %32 = vector.shape_cast %31 : vector<1x1x32xf32> to vector<1x32xf32>
    %c0_18 = arith.constant 0 : index
    %c1_19 = arith.constant 1 : index
    %c0_20 = arith.constant 0 : index
    %c0_21 = arith.constant 0 : index
    %33 = vector.load %arg3[%c0_18, %c1_19, %c0_20, %c0_21] : memref<1x4x16x4xf32, #tpu.memory_space<vmem>>, vector<1x1x16x4xf32>
    %34 = vector.shape_cast %33 : vector<1x1x16x4xf32> to vector<16x4xf32>
    %cst_22 = arith.constant -1.000000e+30 : f32
    %35 = vector.broadcast %cst_22 : f32 to vector<1x32xf32>
    %36 = arith.select %27, %32, %35 : vector<1x32xf32>
    %cst_23 = arith.constant 0.000000e+00 : f32
    %37 = vector.broadcast %cst_23 : f32 to vector<16x4xf32>
    %38 = arith.select %27, %34, %37 : vector<16x4xf32>
    %39 = arith.addf %18, %38 : vector<16x4xf32>
    %40 = arith.extui %27 : i1 to i32
    %41 = arith.sitofp %40 : i32 to f32
    %42 = arith.addf %21, %41 : f32
    %43 = arith.maximumf %15, %36 : vector<1x32xf32>
    %cst_24 = arith.constant 0.000000e+00 : f32
    %44 = vector.broadcast %cst_24 : f32 to vector<1x32xf32>
    %45 = arith.subf %15, %43 : vector<1x32xf32>
    %46 = math.exp %45 : vector<1x32xf32>
    %47 = arith.addf %44, %46 : vector<1x32xf32>
    %48 = arith.subf %36, %43 : vector<1x32xf32>
    %49 = math.exp %48 : vector<1x32xf32>
    %50 = arith.addf %47, %49 : vector<1x32xf32>
    %51 = math.log %50 : vector<1x32xf32>
    %52 = arith.addf %43, %51 : vector<1x32xf32>
    %cst_25 = arith.constant 0.000000e+00 : f32
    %53 = arith.cmpf ogt, %42, %cst_25 : f32
    %cst_26 = arith.constant 0.000000e+00 : f32
    %54 = vector.broadcast %cst_26 : f32 to vector<1x32xf32>
    %55 = arith.select %53, %52, %54 : vector<1x32xf32>
    %cst_27 = arith.constant 1.000000e+00 : f32
    %56 = arith.maximumf %42, %cst_27 : f32
    %57 = vector.broadcast %56 : f32 to vector<16x4xf32>
    %58 = arith.divf %39, %57 : vector<16x4xf32>
    %cst_28 = arith.constant 0.000000e+00 : f32
    %59 = vector.broadcast %cst_28 : f32 to vector<16x4xf32>
    %60 = arith.select %53, %58, %59 : vector<16x4xf32>
    %cst_29 = arith.constant 0.000000e+00 : f32
    %61 = vector.broadcast %cst_29 : f32 to vector<16x4xf32>
    %62 = arith.index_cast %arg0 : i32 to index
    %c2 = arith.constant 2 : index
    %63 = memref.load %arg1[%62, %c2] : memref<2x4xi32, #tpu.memory_space<smem>>
    %c0_i32_30 = arith.constant 0 : i32
    %64 = arith.cmpi sge, %63, %c0_i32_30 : i32
    %c1_i32_31 = arith.constant 1 : i32
    %65 = arith.addi %63, %c1_i32_31 : i32
    %c16_i32_32 = arith.constant 16 : i32
    %66 = arith.cmpi slt, %65, %c16_i32_32 : i32
    %67 = arith.andi %64, %66 : i1
    %c1_i32_33 = arith.constant 1 : i32
    %68 = arith.addi %63, %c1_i32_33 : i32
    %c0_i32_34 = arith.constant 0 : i32
    %69 = arith.select %67, %68, %c0_i32_34 : i32
    %c0_35 = arith.constant 0 : index
    %70 = arith.index_cast %69 : i32 to index
    %c0_36 = arith.constant 0 : index
    %71 = vector.load %arg2[%c0_35, %70, %c0_36] : memref<1x16x32xf32, #tpu.memory_space<vmem>>, vector<1x1x32xf32>
    %72 = vector.shape_cast %71 : vector<1x1x32xf32> to vector<1x32xf32>
    %c0_37 = arith.constant 0 : index
    %c2_38 = arith.constant 2 : index
    %c0_39 = arith.constant 0 : index
    %c0_40 = arith.constant 0 : index
    %73 = vector.load %arg3[%c0_37, %c2_38, %c0_39, %c0_40] : memref<1x4x16x4xf32, #tpu.memory_space<vmem>>, vector<1x1x16x4xf32>
    %74 = vector.shape_cast %73 : vector<1x1x16x4xf32> to vector<16x4xf32>
    %cst_41 = arith.constant -1.000000e+30 : f32
    %75 = vector.broadcast %cst_41 : f32 to vector<1x32xf32>
    %76 = arith.select %67, %72, %75 : vector<1x32xf32>
    %cst_42 = arith.constant 0.000000e+00 : f32
    %77 = vector.broadcast %cst_42 : f32 to vector<16x4xf32>
    %78 = arith.select %67, %74, %77 : vector<16x4xf32>
    %79 = arith.addf %61, %78 : vector<16x4xf32>
    %80 = arith.extui %67 : i1 to i32
    %81 = arith.sitofp %80 : i32 to f32
    %cst_43 = arith.constant 0.000000e+00 : f32
    %82 = arith.addf %cst_43, %81 : f32
    %83 = arith.index_cast %arg0 : i32 to index
    %c3 = arith.constant 3 : index
    %84 = memref.load %arg1[%83, %c3] : memref<2x4xi32, #tpu.memory_space<smem>>
    %c0_i32_44 = arith.constant 0 : i32
    %85 = arith.cmpi sge, %84, %c0_i32_44 : i32
    %c1_i32_45 = arith.constant 1 : i32
    %86 = arith.addi %84, %c1_i32_45 : i32
    %c16_i32_46 = arith.constant 16 : i32
    %87 = arith.cmpi slt, %86, %c16_i32_46 : i32
    %88 = arith.andi %85, %87 : i1
    %c1_i32_47 = arith.constant 1 : i32
    %89 = arith.addi %84, %c1_i32_47 : i32
    %c0_i32_48 = arith.constant 0 : i32
    %90 = arith.select %88, %89, %c0_i32_48 : i32
    %c0_49 = arith.constant 0 : index
    %91 = arith.index_cast %90 : i32 to index
    %c0_50 = arith.constant 0 : index
    %92 = vector.load %arg2[%c0_49, %91, %c0_50] : memref<1x16x32xf32, #tpu.memory_space<vmem>>, vector<1x1x32xf32>
    %93 = vector.shape_cast %92 : vector<1x1x32xf32> to vector<1x32xf32>
    %c0_51 = arith.constant 0 : index
    %c3_52 = arith.constant 3 : index
    %c0_53 = arith.constant 0 : index
    %c0_54 = arith.constant 0 : index
    %94 = vector.load %arg3[%c0_51, %c3_52, %c0_53, %c0_54] : memref<1x4x16x4xf32, #tpu.memory_space<vmem>>, vector<1x1x16x4xf32>
    %95 = vector.shape_cast %94 : vector<1x1x16x4xf32> to vector<16x4xf32>
    %cst_55 = arith.constant -1.000000e+30 : f32
    %96 = vector.broadcast %cst_55 : f32 to vector<1x32xf32>
    %97 = arith.select %88, %93, %96 : vector<1x32xf32>
    %cst_56 = arith.constant 0.000000e+00 : f32
    %98 = vector.broadcast %cst_56 : f32 to vector<16x4xf32>
    %99 = arith.select %88, %95, %98 : vector<16x4xf32>
    %100 = arith.addf %79, %99 : vector<16x4xf32>
    %101 = arith.extui %88 : i1 to i32
    %102 = arith.sitofp %101 : i32 to f32
    %103 = arith.addf %82, %102 : f32
    %104 = arith.maximumf %76, %97 : vector<1x32xf32>
    %cst_57 = arith.constant 0.000000e+00 : f32
    %105 = vector.broadcast %cst_57 : f32 to vector<1x32xf32>
    %106 = arith.subf %76, %104 : vector<1x32xf32>
    %107 = math.exp %106 : vector<1x32xf32>
    %108 = arith.addf %105, %107 : vector<1x32xf32>
    %109 = arith.subf %97, %104 : vector<1x32xf32>
    %110 = math.exp %109 : vector<1x32xf32>
    %111 = arith.addf %108, %110 : vector<1x32xf32>
    %112 = math.log %111 : vector<1x32xf32>
    %113 = arith.addf %104, %112 : vector<1x32xf32>
    %cst_58 = arith.constant 0.000000e+00 : f32
    %114 = arith.cmpf ogt, %103, %cst_58 : f32
    %cst_59 = arith.constant 0.000000e+00 : f32
    %115 = vector.broadcast %cst_59 : f32 to vector<1x32xf32>
    %116 = arith.select %114, %113, %115 : vector<1x32xf32>
    %cst_60 = arith.constant 1.000000e+00 : f32
    %117 = arith.maximumf %103, %cst_60 : f32
    %118 = vector.broadcast %117 : f32 to vector<16x4xf32>
    %119 = arith.divf %100, %118 : vector<16x4xf32>
    %cst_61 = arith.constant 0.000000e+00 : f32
    %120 = vector.broadcast %cst_61 : f32 to vector<16x4xf32>
    %121 = arith.select %114, %119, %120 : vector<16x4xf32>
    %122 = arith.mulf %60, %121 : vector<16x4xf32>
    %cst_62 = arith.constant dense<0.000000e+00> : vector<16xf32>
    %123 = vector.multi_reduction <add>, %122, %cst_62 [1] : vector<16x4xf32> to vector<16xf32>
    %124 = vector.shape_cast %123 : vector<16xf32> to vector<16x1xf32>
    %cst_63 = arith.constant 4.000000e+00 : f32
    %125 = vector.broadcast %cst_63 : f32 to vector<16x1xf32>
    %126 = arith.divf %124, %125 : vector<16x1xf32>
    %cst_64 = arith.constant dense<0.000000e+00> : vector<1xf32>
    %127 = vector.multi_reduction <add>, %126, %cst_64 [0] : vector<16x1xf32> to vector<1xf32>
    %128 = vector.shape_cast %127 : vector<1xf32> to vector<1x1xf32>
    %cst_65 = arith.constant 9.99999974E-6 : f32
    %129 = vector.broadcast %cst_65 : f32 to vector<1x1xf32>
    %130 = arith.addf %128, %129 : vector<1x1xf32>
    %131 = vector.broadcast %130 : vector<1x1xf32> to vector<16x1xf32>
    %132 = arith.divf %126, %131 : vector<16x1xf32>
    %c0_66 = arith.constant 0 : index
    %c0_67 = arith.constant 0 : index
    %c0_68 = arith.constant 0 : index
    %133 = vector.load %arg2[%c0_66, %c0_67, %c0_68] : memref<1x16x32xf32, #tpu.memory_space<vmem>>, vector<1x16x32xf32>
    %134 = vector.shape_cast %133 : vector<1x16x32xf32> to vector<16x32xf32>
    %135 = vector.broadcast %132 : vector<16x1xf32> to vector<16x32xf32>
    %136 = arith.mulf %135, %134 : vector<16x32xf32>
    %cst_69 = arith.constant dense<0.000000e+00> : vector<32xf32>
    %137 = vector.multi_reduction <add>, %136, %cst_69 [0] : vector<16x32xf32> to vector<32xf32>
    %138 = vector.shape_cast %137 : vector<32xf32> to vector<1x32xf32>
    %139 = vector.shape_cast %55 : vector<1x32xf32> to vector<1x1x32xf32>
    %c0_70 = arith.constant 0 : index
    %c0_71 = arith.constant 0 : index
    %c0_72 = arith.constant 0 : index
    %140 = vector.load %arg4[%c0_70, %c0_71, %c0_72] : memref<1x3x32xf32, #tpu.memory_space<vmem>>, vector<1x1x32xf32>
    tpu.vector_store %arg4[%c0_70, %c0_71, %c0_72], %139 {strides = array<i32>} : memref<1x3x32xf32, #tpu.memory_space<vmem>>, vector<1x1x32xf32>,
    %141 = vector.shape_cast %116 : vector<1x32xf32> to vector<1x1x32xf32>
    %c0_73 = arith.constant 0 : index
    %c1_74 = arith.constant 1 : index
    %c0_75 = arith.constant 0 : index
    %142 = vector.load %arg4[%c0_73, %c1_74, %c0_75] : memref<1x3x32xf32, #tpu.memory_space<vmem>>, vector<1x1x32xf32>
    tpu.vector_store %arg4[%c0_73, %c1_74, %c0_75], %141 {strides = array<i32>} : memref<1x3x32xf32, #tpu.memory_space<vmem>>, vector<1x1x32xf32>,
    %143 = vector.shape_cast %138 : vector<1x32xf32> to vector<1x1x32xf32>
    %c0_76 = arith.constant 0 : index
    %c2_77 = arith.constant 2 : index
    %c0_78 = arith.constant 0 : index
    %144 = vector.load %arg4[%c0_76, %c2_77, %c0_78] : memref<1x3x32xf32, #tpu.memory_space<vmem>>, vector<1x1x32xf32>
    tpu.vector_store %arg4[%c0_76, %c2_77, %c0_78], %143 {strides = array<i32>} : memref<1x3x32xf32, #tpu.memory_space<vmem>>, vector<1x1x32xf32>,
    return
  }
  func.func @transform_0(%arg0: i32, %arg1: memref<2x4xi32, #tpu.memory_space<smem>>) -> (i32, i32, i32) {
    %c0_i32 = arith.constant 0 : i32
    %c0_i32_0 = arith.constant 0 : i32
    %c0_i32_1 = arith.constant 0 : i32
    return %arg0, %c0_i32, %c0_i32_0 : i32, i32, i32
  }
  func.func @transform_1(%arg0: i32, %arg1: memref<2x4xi32, #tpu.memory_space<smem>>) -> (i32, i32, i32, i32) {
    %c0_i32 = arith.constant 0 : i32
    %c0_i32_0 = arith.constant 0 : i32
    %c0_i32_1 = arith.constant 0 : i32
    %c0_i32_2 = arith.constant 0 : i32
    return %arg0, %c0_i32, %c0_i32_0, %c0_i32_1 : i32, i32, i32, i32
  }
  func.func @transform_2(%arg0: i32, %arg1: memref<2x4xi32, #tpu.memory_space<smem>>) -> (i32, i32, i32) {
    %c0_i32 = arith.constant 0 : i32
    %c0_i32_0 = arith.constant 0 : i32
    %c0_i32_1 = arith.constant 0 : i32
    return %arg0, %c0_i32, %c0_i32_0 : i32, i32, i32
  }
}

</mosaic_0001>

<llo_original>
// kernel: tpu_custom_call.1
$region0: #{tpu_custom_call.1}
  #allocation0 [shape = 'u32[]', space=smem, size = 0x4, offset = 0x4, fixed_abs, tag = 'smem constant byte address 0x4 - core index']
  #allocation1 [shape = 'u32[144,128]{1,0:T(1,128)}', space=vmem, size = 0x12000, scoped, tag = 'internal scratch']
  #allocation2 [shape = 's32[1]{0}', space=sflag, size = 0x4, scoped, tag = 'scoped memory for tpu_custom_call.1']
  #allocation3 [shape = 'u8[1024]{0}', space=smem, size = 0x400, scoped, tag = 'prefetched SMEM operand 0']
  %s0 = inlined_call_operand.vmem [shape: s32[2,4], index: 0, kind: input, shape index: {}]
  %s1 = inlined_call_operand.vmem [shape: f32[2,16,32], index: 1, kind: input, shape index: {}]
  %s2 = inlined_call_operand.vmem [shape: f32[2,4,16,4], index: 2, kind: input, shape index: {}]
  %s3 = inlined_call_operand.vmem [shape: f32[2,3,32], index: 3, kind: output, shape index: {}]
  %s4 = sld [smem:[#allocation0]]
  $region41: #{tpu_custom_call.1} parent=0
    _
  %s6 = ssub.s32 1, %s4
  %s7 = scalar_select 0, %s6, %s4
  %s8 = sshll.u32 %s0, 4
  %s9 = int_to_ptr.vmem [resolvable:$true] %s8
  %11 = dma.vmem_to_smem %s9, 32, [#allocation3], [#allocation2]
  %12 = dma.done [#allocation2], 32
  %13 = sfence
  loop: start=0, step=1, limit=4
  $region2: #{tpu_custom_call.1} parent=0 // loop_pre_header
    _
  $region3: #{tpu_custom_call.1} parent=0 // loop_header
    %s15 = sphi 0, %s19
    %p16 = scmp.ge.s32.totalorder %s15, 4
    %s25 = sphi 0, %s27
    %s28 = sphi 0, %s25
    %s29 = sphi 0, %s28
    %s45 = sphi 0, %s29
    %s51 = sphi 0, %s53
    %s54 = sphi 0, %s51
    %s55 = sphi 0, %s54
    %s71 = sphi 0, %s55
    %s77 = sphi 0, %s79
    %s80 = sphi 0, %s77
    %s81 = sphi 0, %s80
    %s97 = sphi 0, %s81
  $region4: #{tpu_custom_call.1} parent=0 // loop_header_branch
    %18 = sbr.rel (%p16) target = $region8
  $region5: #{tpu_custom_call.1} parent=0 // loop_body
    %s20 = ssub.s32 %s15, 1
    %s21 = ssub.s32 %s15, 2
    %s22 = sadd.s32 %s15, 1
    %s23 = ssub.s32 %s15, %s22
    %p24 = scmp.eq.s32.totalorder %s23, 0
    %s26 = sadd.s32 %s25, 1
    %s27 = scalar_select %p24, %s25, %s26
    %p30 = pneg %p24
    %p31 = scmp.eq.s32.totalorder %s15, 1
    %p32 = por %p30, %p31
    %p33 = scmp.ne.s32.totalorder %s25, %s28
    %p34 = scmp.eq.s32.totalorder %s15, 0
    %p35 = por %p33, %p34
    %p36 = scmp.ne.s32.totalorder %s25, %s28
    %p37 = scmp.eq.s32.totalorder %s20, 1
    %p38 = por %p36, %p37
    %p39 = scmp.ne.s32.totalorder %s28, %s29
    %p40 = scmp.eq.s32.totalorder %s20, 0
    %p41 = por %p39, %p40
    %p42 = scmp.ne.s32.totalorder %s28, %s29
    %p43 = scmp.eq.s32.totalorder %s21, 1
    %p44 = por %p42, %p43
    %p46 = scmp.ne.s32.totalorder %s29, %s45
    %p47 = scmp.eq.s32.totalorder %s21, 0
    %p48 = por %p46, %p47
    %s49 = ssub.s32 %s15, %s22
    %p50 = scmp.eq.s32.totalorder %s49, 0
    %s52 = sadd.s32 %s51, 1
    %s53 = scalar_select %p50, %s51, %s52
    %p56 = pneg %p50
    %p57 = scmp.eq.s32.totalorder %s15, 1
    %p58 = por %p56, %p57
    %p59 = scmp.ne.s32.totalorder %s51, %s54
    %p60 = scmp.eq.s32.totalorder %s15, 0
    %p61 = por %p59, %p60
    %p62 = scmp.ne.s32.totalorder %s51, %s54
    %p63 = scmp.eq.s32.totalorder %s20, 1
    %p64 = por %p62, %p63
    %p65 = scmp.ne.s32.totalorder %s54, %s55
    %p66 = scmp.eq.s32.totalorder %s20, 0
    %p67 = por %p65, %p66
    %p68 = scmp.ne.s32.totalorder %s54, %s55
    %p69 = scmp.eq.s32.totalorder %s21, 1
    %p70 = por %p68, %p69
    %p72 = scmp.ne.s32.totalorder %s55, %s71
    %p73 = scmp.eq.s32.totalorder %s21, 0
    %p74 = por %p72, %p73
    %s75 = ssub.s32 %s15, %s22
    %p76 = scmp.eq.s32.totalorder %s75, 0
    %s78 = sadd.s32 %s77, 1
    %s79 = scalar_select %p76, %s77, %s78
    %p82 = pneg %p76
    %p83 = scmp.eq.s32.totalorder %s15, 1
    %p84 = por %p82, %p83
    %p85 = scmp.ne.s32.totalorder %s77, %s80
    %p86 = scmp.eq.s32.totalorder %s15, 0
    %p87 = por %p85, %p86
    %p88 = scmp.ne.s32.totalorder %s77, %s80
    %p89 = scmp.eq.s32.totalorder %s20, 1
    %p90 = por %p88, %p89
    %p91 = scmp.ne.s32.totalorder %s80, %s81
    %p92 = scmp.eq.s32.totalorder %s20, 0
    %p93 = por %p91, %p92
    %p94 = scmp.ne.s32.totalorder %s80, %s81
    %p95 = scmp.eq.s32.totalorder %s21, 1
    %p96 = por %p94, %p95
    %p98 = scmp.ne.s32.totalorder %s81, %s97
    %p99 = scmp.eq.s32.totalorder %s21, 0
    %p100 = por %p98, %p99
    %p101 = scmp.le.s32.totalorder 1, %s15
    %p102 = scmp.lt.s32.totalorder %s15, 3
    %p103 = pnand %p101, %p102
    %p104 = pneg %p103
    // Predicated region
    $region9: #{tpu_custom_call.1} parent=5 // pred_check
      _
    $region10: #{tpu_custom_call.1} parent=5 // pred_check_branch
      %106 = sbr.rel (%p103) target = $region12
    $region11: #{tpu_custom_call.1} parent=5 // pred_region
      %s107 = ssub.s32 %s15, 1
    $region12: #{tpu_custom_call.1} parent=5 // pred_fallthru
      _
    %p108 = scmp.lt.s32.totalorder %s15, 2
    // Predicated region
    $region13: #{tpu_custom_call.1} parent=5 // pred_check
      %p109 = pneg %p108
    $region14: #{tpu_custom_call.1} parent=5 // pred_check_branch
      %111 = sbr.rel (%p109) target = $region16
    $region15: #{tpu_custom_call.1} parent=5 // pred_region
      // Predicated region
      $region17: #{tpu_custom_call.1} parent=15 // pred_check
        %p112 = pneg %p35
      $region18: #{tpu_custom_call.1} parent=15 // pred_check_branch
        %114 = sbr.rel (%p112) target = $region20
      $region19: #{tpu_custom_call.1} parent=15 // pred_region
        %p115 = scmp.lt.s32.totalorder %s15, 1
        %s116 = scalar_select %p115, %s15, 1
        %s117 = smul.addr %s116, 2
        %s118 = smul.addr %s117, 8
        %s119 = scalar_lea.vmem %s1, %s118
      $region20: #{tpu_custom_call.1} parent=15 // pred_fallthru
        _
      // Predicated region
      $region21: #{tpu_custom_call.1} parent=15 // pred_check
        %p120 = pneg %p61
      $region22: #{tpu_custom_call.1} parent=15 // pred_check_branch
        %122 = sbr.rel (%p120) target = $region24
      $region23: #{tpu_custom_call.1} parent=15 // pred_region
        %p123 = scmp.lt.s32.totalorder %s15, 1
        %s124 = scalar_select %p123, %s15, 1
        %s125 = smul.addr %s124, 8
        %s126 = smul.addr %s125, 8
        %s127 = scalar_lea.vmem %s2, %s126
      $region24: #{tpu_custom_call.1} parent=15 // pred_fallthru
        _
    $region16: #{tpu_custom_call.1} parent=5 // pred_fallthru
      _
    %p128 = scmp.le.s32.totalorder 1, %s15
    %p129 = scmp.lt.s32.totalorder %s15, 3
    %p130 = pnand %p128, %p129
    %p131 = pneg %p130
    // Predicated region
    $region25: #{tpu_custom_call.1} parent=5 // pred_check
      _
    $region26: #{tpu_custom_call.1} parent=5 // pred_check_branch
      %133 = sbr.rel (%p130) target = $region28
    $region27: #{tpu_custom_call.1} parent=5 // pred_region
      %s134 = ssub.s32 %s15, 1
      %p135 = scmp.lt.s32.totalorder %s20, 1
      %s136 = scalar_select %p135, %s20, 1
      %s137 = smul.addr %s136, 2
      %s138 = smul.addr %s137, 8
      %s139 = scalar_lea.vmem %s1, %s138
      %p140 = pneg %p41
      %p141 = pneg %p38
      %p142 = scmp.lt.s32.totalorder %s20, 1
      %s143 = scalar_select %p142, %s20, 1
      %s144 = smul.addr %s143, 8
      %s145 = smul.addr %s144, 8
      %s146 = scalar_lea.vmem %s2, %s145
      %p147 = pneg %p67
      %p148 = pneg %p64
      %p149 = pneg %p93
      %p150 = pneg %p90
      %p151 = scmp.lt.s32.totalorder %s20, 1
      %s152 = scalar_select %p151, %s20, 1
      %s153 = smul.addr %s152, 4
      %s154 = scalar_lea.vmem %s3, %s153
      %p155 = scmp.lt.s32.totalorder %s20, 1
      %s156 = scalar_select %p155, %s20, 1
      %s157 = smul.addr %s156, 2
      %s158 = smul.addr %s157, 8
      %s159 = scalar_lea.vmem %s1, %s158
      %p160 = scmp.lt.s32.totalorder %s20, 1
      %s161 = scalar_select %p160, %s20, 1
      %s162 = smul.addr %s161, 8
      %s163 = smul.addr %s162, 8
      %s164 = scalar_lea.vmem %s2, %s163
      %p165 = scmp.lt.s32.totalorder %s20, 1
      %s166 = scalar_select %p165, %s20, 1
      %s167 = smul.addr %s166, 4
      %s168 = scalar_lea.vmem %s3, %s167
      %s169 = smul.u32 %s20, 128
      %s170 = sld [smem:[#allocation3 + %s169]]
      %p171 = scmp.ge.s32.totalorder %s170, 0
      %s172 = sadd.s32 %s170, 1
      %p173 = scmp.lt.s32.totalorder %s172, 16
      %p174 = pnand %p171, %p173
      %p175 = pneg %p174
      %s176 = scalar_select %p175, %s172, 0
      %s177 = scalar_lea.vmem %s159, %s176
      %v178 = vld [vmem:[%s177] sm:$0x1]
      %v179 = vld [vmem:[%s164] sm:$0xff]
      %v180 = vld [vmem:[%s164 + $0x8] sm:$0xff]
      %s181 = scalar_select %p175, 1, 0
      %v182 = vstv %s181
      %vm183 = vcmp.eq.s32.totalorder %v182, 1
      %v184 = vsel %vm183, %v178, -1e+30
      %v185 = vsel %vm183, %v179, 0.0
      %v186 = vsel %vm183, %v180, 0.0
      %v187 = vadd.f32 %v185, 0.0
      %v188 = vadd.f32 %v186, 0.0
      %s189 = scvt.s32.f32 %s181
      %s190 = sadd.f32 %s189, 0.0
      %s191 = sadd.s32 %s169, 1
      %s192 = sld [smem:[#allocation3 + %s191]]
      %p193 = scmp.ge.s32.totalorder %s192, 0
      %s194 = sadd.s32 %s192, 1
      %p195 = scmp.lt.s32.totalorder %s194, 16
      %p196 = pnand %p193, %p195
      %p197 = pneg %p196
      %s198 = scalar_select %p197, %s194, 0
      %s199 = scalar_lea.vmem %s159, %s198
      %v200 = vld [vmem:[%s199] sm:$0x1]
      %s201 = scalar_lea.vmem %s164, 16
      %v202 = vld [vmem:[%s201] sm:$0xff]
      %v203 = vld [vmem:[%s201 + $0x8] sm:$0xff]
      %s204 = scalar_select %p197, 1, 0
      %v205 = vstv %s204
      %vm206 = vcmp.eq.s32.totalorder %v205, 1
      %v207 = vsel %vm206, %v200, -1e+30
      %v208 = vsel %vm206, %v202, 0.0
      %v209 = vsel %vm206, %v203, 0.0
      %v210 = vadd.f32 %v187, %v208
      %v211 = vadd.f32 %v188, %v209
      %s212 = scvt.s32.f32 %s204
      %s213 = sadd.f32 %s190, %s212
      %v214 = vmax.f32 %v184, %v207
      %v215 = vsub.f32 %v184, %v214
      %v216 = vmul.f32 %v215, 1.442695
      %v217 = vpow.pop %v216
      %v218 = vadd.f32 %v217, 0.0
      %v219 = vsub.f32 %v207, %v214
      %v220 = vmul.f32 %v219, 1.442695
      %v221 = vpow.pop %v220
      %v222 = vadd.f32 %v218, %v221
      %v223 = vlog2.pop %v222
      %v224 = vmul.f32 %v223, 0.6931472
      %v225 = vadd.f32 %v214, %v224
      %p226 = scmp.gt.f32.partialorder %s213, 0.0
      %s227 = scalar_select %p226, 1, 0
      %v228 = vstv %s227
      %vm229 = vcmp.eq.s32.totalorder %v228, 1
      %v230 = vsel %vm229, %v225, 0.0
      %s231 = smax.f32 %s213, 1.0
      %v232 = vstv %s231
      %v233 = vrcp.pop %v232
      %v234 = vmul.f32 %v210, %v233
      %v235 = vmul.f32 %v211, %v233
      %v236 = vsel %vm229, %v234, 0.0
      %v237 = vsel %vm229, %v235, 0.0
      %s238 = sadd.s32 %s169, 2
      %s239 = sld [smem:[#allocation3 + %s238]]
      %p240 = scmp.ge.s32.totalorder %s239, 0
      %s241 = sadd.s32 %s239, 1
      %p242 = scmp.lt.s32.totalorder %s241, 16
      %p243 = pnand %p240, %p242
      %p244 = pneg %p243
      %s245 = scalar_select %p244, %s241, 0
      %s246 = scalar_lea.vmem %s159, %s245
      %v247 = vld [vmem:[%s246] sm:$0x1]
      %s248 = scalar_lea.vmem %s164, 32
      %v249 = vld [vmem:[%s248] sm:$0xff]
      %v250 = vld [vmem:[%s248 + $0x8] sm:$0xff]
      %s251 = scalar_select %p244, 1, 0
      %v252 = vstv %s251
      %vm253 = vcmp.eq.s32.totalorder %v252, 1
      %v254 = vsel %vm253, %v247, -1e+30
      %v255 = vsel %vm253, %v249, 0.0
      %v256 = vsel %vm253, %v250, 0.0
      %v257 = vadd.f32 %v255, 0.0
      %v258 = vadd.f32 %v256, 0.0
      %s259 = scvt.s32.f32 %s251
      %s260 = sadd.f32 %s259, 0.0
      %s261 = sadd.s32 %s169, 3
      %s262 = sld [smem:[#allocation3 + %s261]]
      %p263 = scmp.ge.s32.totalorder %s262, 0
      %s264 = sadd.s32 %s262, 1
      %p265 = scmp.lt.s32.totalorder %s264, 16
      %p266 = pnand %p263, %p265
      %p267 = pneg %p266
      %s268 = scalar_select %p267, %s264, 0
      %s269 = scalar_lea.vmem %s159, %s268
      %v270 = vld [vmem:[%s269] sm:$0x1]
      %s271 = scalar_lea.vmem %s164, 48
      %v272 = vld [vmem:[%s271] sm:$0xff]
      %v273 = vld [vmem:[%s271 + $0x8] sm:$0xff]
      %s274 = scalar_select %p267, 1, 0
      %v275 = vstv %s274
      %vm276 = vcmp.eq.s32.totalorder %v275, 1
      %v277 = vsel %vm276, %v270, -1e+30
      %v278 = vsel %vm276, %v272, 0.0
      %v279 = vsel %vm276, %v273, 0.0
      %v280 = vadd.f32 %v257, %v278
      %v281 = vadd.f32 %v258, %v279
      %s282 = scvt.s32.f32 %s274
      %s283 = sadd.f32 %s260, %s282
      %v284 = vmax.f32 %v254, %v277
      %v285 = vsub.f32 %v254, %v284
      %v286 = vmul.f32 %v285, 1.442695
      %v287 = vpow.pop %v286
      %v288 = vadd.f32 %v287, 0.0
      %v289 = vsub.f32 %v277, %v284
      %v290 = vmul.f32 %v289, 1.442695
      %v291 = vpow.pop %v290
      %v292 = vadd.f32 %v288, %v291
      %v293 = vlog2.pop %v292
      %v294 = vmul.f32 %v293, 0.6931472
      %v295 = vadd.f32 %v284, %v294
      %p296 = scmp.gt.f32.partialorder %s283, 0.0
      %s297 = scalar_select %p296, 1, 0
      %v298 = vstv %s297
      %vm299 = vcmp.eq.s32.totalorder %v298, 1
      %v300 = vsel %vm299, %v295, 0.0
      %s301 = smax.f32 %s283, 1.0
      %v302 = vstv %s301
      %v303 = vrcp.pop %v302
      %v304 = vmul.f32 %v280, %v303
      %v305 = vmul.f32 %v281, %v303
      %v306 = vsel %vm299, %v304, 0.0
      %v307 = vsel %vm299, %v305, 0.0
      %v308 = vmul.f32 %v236, %v306
      %v309 = vmul.f32 %v237, %v307
      %vm310 = vcmask 31744
      %v311 = vsel %vm310, %v308, 0.0
      %312 = vadd.xlane.f32.xlu0 %v311
      %v313 = vpop.xlane.xlu0 %312
      %v314 = vsel %vm310, %v309, 0.0
      %315 = vadd.xlane.f32.xlu0 %v314
      %v316 = vpop.xlane.xlu0 %315
      %v317 = vrcp.pop 4.0
      %v318 = vmul.f32 %v313, %v317
      %v319 = vmul.f32 %v316, %v317
      %v320 = vadd.f32 %v318, %v319
      %v321 = vrot.slane %v320, 4
      %v322 = vadd.f32 %v320, %v321
      %v323 = vrot.slane %v322, 2
      %v324 = vadd.f32 %v322, %v323
      %v325 = vrot.slane %v324, 1
      %v326 = vadd.f32 %v324, %v325
      %v327 = vadd.f32 %v326, 1e-05
      %v328 = vrcp.pop %v327
      %v329 = vmul.f32 %v318, %v328
      %v330 = vmul.f32 %v319, %v328
      %v331 = vld [vmem:[%s159] sm:$0xff]
      %v332 = vld [vmem:[%s159 + $0x8] sm:$0xff]
      %v333 = vmul.f32 %v329, %v331
      %v334 = vmul.f32 %v330, %v332
      %vm335 = vcmask 261120
      %v336 = vsel %vm335, %v333, 0.0
      %v337 = vsel %vm335, %v334, 0.0
      %v338 = vadd.f32 %v336, %v337
      %v339 = vrot.slane %v338, 4
      %v340 = vadd.f32 %v338, %v339
      %v341 = vrot.slane %v340, 2
      %v342 = vadd.f32 %v340, %v341
      %v343 = vrot.slane %v342, 1
      %v344 = vadd.f32 %v342, %v343
      %vm345 = vcmask 253952
      %346 = vst.msk [vmem:[%s168] sm:$0x1] %vm345, %v230
      %347 = vst.msk [vmem:[%s168 + $0x1] sm:$0x1] %vm345, %v300
      %348 = vst.msk [vmem:[%s168 + $0x2] sm:$0x1] %vm345, %v344
      %p349 = scmp.lt.s32.totalorder %s20, 1
      %s350 = scalar_select %p349, %s20, 1
      %s351 = smul.addr %s350, 4
      %s352 = scalar_lea.vmem %s3, %s351
      // Predicated region
      $region29: #{tpu_custom_call.1} parent=27 // pred_check
        %p353 = pneg %p90
      $region30: #{tpu_custom_call.1} parent=27 // pred_check_branch
        %355 = sbr.rel (%p353) target = $region32
      $region31: #{tpu_custom_call.1} parent=27 // pred_region
        _
      $region32: #{tpu_custom_call.1} parent=27 // pred_fallthru
        _
    $region28: #{tpu_custom_call.1} parent=5 // pred_fallthru
      _
    %p356 = scmp.le.s32.totalorder 2, %s15
    // Predicated region
    $region33: #{tpu_custom_call.1} parent=5 // pred_check
      %p357 = pneg %p356
    $region34: #{tpu_custom_call.1} parent=5 // pred_check_branch
      %359 = sbr.rel (%p357) target = $region36
    $region35: #{tpu_custom_call.1} parent=5 // pred_region
      %s360 = ssub.s32 %s15, 2
      // Predicated region
      $region37: #{tpu_custom_call.1} parent=35 // pred_check
        %p361 = pneg %p96
      $region38: #{tpu_custom_call.1} parent=35 // pred_check_branch
        %363 = sbr.rel (%p361) target = $region40
      $region39: #{tpu_custom_call.1} parent=35 // pred_region
        %p364 = scmp.lt.s32.totalorder %s21, 1
        %s365 = scalar_select %p364, %s21, 1
        %s366 = smul.addr %s365, 4
        %s367 = scalar_lea.vmem %s3, %s366
      $region40: #{tpu_custom_call.1} parent=35 // pred_fallthru
        _
    $region36: #{tpu_custom_call.1} parent=5 // pred_fallthru
      _
  $region6: #{tpu_custom_call.1} parent=0 // loop_footer
    %s19 = sadd.s32 1, %s15
  $region7: #{tpu_custom_call.1} parent=0 // loop_footer_branch
    %14 = sbr.rel target = $region3
  $region8: #{tpu_custom_call.1} parent=0 // loop_exit
    _

</llo_original>
